<compile_context>
chip_gen: v7x
topology: tpu7x:2x2x1
jax: 0.10.0
libtpu: 0.0.40
codegen_flags: <defaults>
</compile_context>

<pallas_src>
import functools
import math

import jax
import jax.numpy as jnp
from jax import lax
from jax.experimental import pallas as pl
from jax.experimental.pallas import tpu as pltpu


def _dws_kernel(x_ref, wc_ref, bias_ref, o_ref, p_ref, *, H, W, K, D, P, Cin):
    """Fused DW-atrous conv + PW conv + BN + ReLU for one image.

    x_ref   : (1, Cin, H*W)        spatially-flattened NCHW input
    wc_ref  : (Cout, K*K*Cin)      folded (depthwise x pointwise x BN-scale) weights
    bias_ref: (Cout, 1)            folded BN bias
    o_ref   : (1, Cout, H*W)       lane-dense NCHW output
    p_ref   : (K*K*Cin, H*W)       im2col scratch (VMEM)
    """
    HW = H * W
    x = x_ref[0]                                              # (Cin, HW)

    # w-coordinate of every flattened position (masks row wrap-around of kx shifts)
    w_idx = lax.broadcasted_iota(jnp.int32, (1, HW), 1) % W

    # Zero the im2col slab; only the virtual-padding borders of shifted taps
    # rely on these zeros, the rest is overwritten below every grid step.
    p_ref[...] = jnp.zeros_like(p_ref)

    # Build the (K*K*Cin, HW) im2col slab with statically shifted lane windows.
    for ky in range(K):
        sy = ky * D - P
        for kx in range(K):
            sx = kx * D - P
            s = sy * W + sx                  # flat shift of this tap
            t = ky * K + kx
            lo = max(0, -s)                  # dst flat range with in-bounds src
            hi = HW - max(0, s)
            val = x[:, lo + s:hi + s]        # (Cin, hi-lo) source window
            if sx != 0:
                valid = (w_idx[:, lo:hi] + sx >= 0) & (w_idx[:, lo:hi] + sx < W)
                val = jnp.where(valid, val, jnp.zeros_like(val))
            p_ref[t * Cin:(t + 1) * Cin, lo:hi] = val

    # One MXU matmul does depthwise + pointwise + BN scale at once.
    y = jnp.dot(wc_ref[...], p_ref[...],
                preferred_element_type=jnp.float32)           # (Cout, HW) f32

    # Folded BN bias + ReLU, then lane-dense store (already NCHW layout).
    y = jnp.maximum(y + bias_ref[...], 0.0)
    o_ref[...] = y[None].astype(o_ref.dtype)


def dws_conv_module(x_nchw, dw_w, pw_w, bn_gamma, bn_beta, bn_mean, bn_var, *,
                    kernel_size, padding, dilation, eps=1e-5):
    """x_nchw: (N, Cin, H, W). dw_w: (Cin, 1, K, K). pw_w: (Cout, Cin, 1, 1)."""
    N, Cin, H, W = x_nchw.shape
    Cout = pw_w.shape[0]
    K, D, P = kernel_size, dilation, padding

    assert H + 2 * P - D * (K - 1) == H and W + 2 * P - D * (K - 1) == W, \
        "configure padding for 'same' output"

    HW = H * W
    KKC = K * K * Cin

    # ---- free layout plumbing: NCHW stays NCHW, just flatten spatial dims ----
    x_flat = x_nchw.reshape(N, Cin, HW)

    # ---- fold DW taps, PW weights and BN scale into one matrix (done once) ----
    scale = bn_gamma / jnp.sqrt(bn_var + eps)                        # (Cout,)
    bias = (bn_beta - bn_mean * scale).astype(jnp.float32)           # (Cout,)
    dw_t = jnp.transpose(dw_w[:, 0, :, :], (1, 2, 0)).reshape(K * K, Cin)  # [t, ci]
    pw = pw_w[:, :, 0, 0]                                            # (Cout, Cin)
    wc = (scale[:, None, None] * pw[:, None, :] * dw_t[None, :, :])  # (Cout, K*K, Cin)
    wc = wc.reshape(Cout, KKC).astype(x_nchw.dtype)
    bias2d = bias.reshape(Cout, 1)

    kernel = functools.partial(_dws_kernel, H=H, W=W, K=K, D=D, P=P, Cin=Cin)

    out_flat = pl.pallas_call(
        kernel,
        out_shape=jax.ShapeDtypeStruct((N, Cout, HW), x_nchw.dtype),
        grid_spec=pltpu.PrefetchScalarGridSpec(
            num_scalar_prefetch=0,
            grid=(N,),
            in_specs=[
                pl.BlockSpec((1, Cin, HW), lambda n: (n, 0, 0)),   # activation
                pl.BlockSpec((Cout, KKC), lambda n: (0, 0)),       # folded weights
                pl.BlockSpec((Cout, 1), lambda n: (0, 0)),         # folded bias
            ],
            out_specs=pl.BlockSpec((1, Cout, HW), lambda n: (n, 0, 0)),
            scratch_shapes=[pltpu.VMEM((KKC, HW), x_nchw.dtype)],  # im2col slab
        ),
        compiler_params=pltpu.CompilerParams(
            dimension_semantics=("parallel",),
            # Plenty for these tiles; size to ~2x(in+out+im2col) when blocks grow.
            vmem_limit_bytes=32 * 1024 * 1024,
        ),
    )(x_flat, wc, bias2d)

    return out_flat.reshape(N, Cout, H, W)   # free reshape, already NCHW


def _reference(x_nchw, dw_w, pw_w, bn_gamma, bn_beta, bn_mean, bn_var,
               *, kernel_size, padding, dilation, eps=1e-5):
    Cin = x_nchw.shape[1]
    dn = ("NCHW", "OIHW", "NCHW")
    y = lax.conv_general_dilated(
        x_nchw, dw_w, window_strides=(1, 1),
        padding=[(padding, padding), (padding, padding)],
        rhs_dilation=(dilation, dilation),
        dimension_numbers=dn, feature_group_count=Cin)
    y = lax.conv_general_dilated(
        y, pw_w, window_strides=(1, 1), padding="VALID", dimension_numbers=dn)
    scale = (bn_gamma / jnp.sqrt(bn_var + eps)).reshape(1, -1, 1, 1)
    bias = (bn_beta - bn_mean * bn_gamma / jnp.sqrt(bn_var + eps)).reshape(1, -1, 1, 1)
    return jnp.maximum(y * scale + bias, 0.0)


if __name__ == "__main__":
    # small shapes consistent with the module
    N, Cin, Cout, H, W = 2, 4, 8, 16, 16
    K, D, P = 3, 2, 2      # kernel_size=3, dilation=2, padding=2 -> 'same'

    key = jax.random.PRNGKey(0)
    k_x, k_dw, k_pw = jax.random.split(key, 3)

    x = jax.random.normal(k_x, (N, Cin, H, W), jnp.float32)

    # kaiming_normal_ (fan_in, a=0): std = sqrt(2 / fan_in)
    dw_w = jax.random.normal(k_dw, (Cin, 1, K, K), jnp.float32) * math.sqrt(2.0 / (K * K))
    pw_w = jax.random.normal(k_pw, (Cout, Cin, 1, 1), jnp.float32) * math.sqrt(2.0 / Cin)

    # BatchNorm params per _init_weight: gamma=1, beta=0; running stats mean=0, var=1
    bn_gamma = jnp.ones((Cout,), jnp.float32)
    bn_beta = jnp.zeros((Cout,), jnp.float32)
    bn_mean = jnp.zeros((Cout,), jnp.float32)
    bn_var = jnp.ones((Cout,), jnp.float32)

    out = dws_conv_module(x, dw_w, pw_w, bn_gamma, bn_beta, bn_mean, bn_var,
                          kernel_size=K, padding=P, dilation=D)
    out = jax.block_until_ready(out)

    ref = _reference(x, dw_w, pw_w, bn_gamma, bn_beta, bn_mean, bn_var,
                     kernel_size=K, padding=P, dilation=D)
    assert out.shape == (N, Cout, H, W)
    assert jnp.allclose(out, ref, atol=1e-4, rtol=1e-4), "mismatch vs reference"

    print("KERNEL_OK")
</pallas_src>

<mosaic_0001>
module attributes {stable_mosaic.version = 11 : i64} {
  func.func @_dws_kernel(%arg0: i32, %arg1: memref<1x4x256xf32, #tpu.memory_space<vmem>>, %arg2: memref<8x36xf32, #tpu.memory_space<vmem>>, %arg3: memref<8x1xf32, #tpu.memory_space<vmem>>, %arg4: memref<1x8x256xf32, #tpu.memory_space<vmem>>, %arg5: memref<36x256xf32, #tpu.memory_space<vmem>>) attributes {dimension_semantics = [#tpu.dimension_semantics<parallel>], iteration_bounds = array<i64: 2>, scalar_prefetch = 0 : i64, scratch_operands = 1 : i64, tpu.core_type = #tpu.core_type<tc>, window_params = [{transform_indices = @transform_0, window_bounds = array<i64: 1, 4, 256>}, {pipeline_mode = #tpu.pipeline_mode<synchronous>, transform_indices = @transform_1, window_bounds = array<i64: 8, 36>}, {pipeline_mode = #tpu.pipeline_mode<synchronous>, transform_indices = @transform_2, window_bounds = array<i64: 8, 1>}, {transform_indices = @transform_3, window_bounds = array<i64: 1, 8, 256>}]} {
    %c0 = arith.constant 0 : index
    %c0_0 = arith.constant 0 : index
    %c0_1 = arith.constant 0 : index
    %0 = vector.load %arg1[%c0, %c0_0, %c0_1] : memref<1x4x256xf32, #tpu.memory_space<vmem>>, vector<1x4x256xf32>
    %1 = vector.shape_cast %0 : vector<1x4x256xf32> to vector<4x256xf32>
    %2 = tpu.iota {dimensions = array<i32: 1>} : vector<1x256xi32>
    %c16_i32 = arith.constant 16 : i32
    %c0_i32 = arith.constant 0 : i32
    %3 = arith.cmpi eq, %c16_i32, %c0_i32 : i32
    %c1_i32 = arith.constant 1 : i32
    %4 = arith.select %3, %c1_i32, %c16_i32 : i32
    %5 = vector.broadcast %4 : i32 to vector<1x256xi32>
    %6 = arith.remsi %2, %5 : vector<1x256xi32>
    %c0_i32_2 = arith.constant 0 : i32
    %7 = vector.broadcast %c0_i32_2 : i32 to vector<1x256xi32>
    %8 = arith.cmpi ne, %6, %7 : vector<1x256xi32>
    %c0_i32_3 = arith.constant 0 : i32
    %9 = vector.broadcast %c0_i32_3 : i32 to vector<1x256xi32>
    %10 = arith.cmpi slt, %6, %9 : vector<1x256xi32>
    %c0_i32_4 = arith.constant 0 : i32
    %11 = arith.cmpi slt, %4, %c0_i32_4 : i32
    %12 = vector.broadcast %11 : i1 to vector<1x256xi1>
    %13 = vector.broadcast %12 : vector<1x256xi1> to vector<1x256xi1>
    %14 = arith.xori %10, %13 : vector<1x256xi1>
    %15 = arith.andi %14, %8 : vector<1x256xi1>
    %16 = vector.broadcast %4 : i32 to vector<1x256xi32>
    %17 = arith.addi %6, %16 : vector<1x256xi32>
    %18 = arith.select %15, %17, %6 : vector<1x256xi1>, vector<1x256xi32>
    %cst = arith.constant 0.000000e+00 : f32
    %19 = vector.broadcast %cst : f32 to vector<36x256xf32>
    %c0_5 = arith.constant 0 : index
    %c0_6 = arith.constant 0 : index
    %20 = vector.load %arg5[%c0_5, %c0_6] : memref<36x256xf32, #tpu.memory_space<vmem>>, vector<36x256xf32>
    tpu.vector_store %arg5[%c0_5, %c0_6], %19 {strides = array<i32>} : memref<36x256xf32, #tpu.memory_space<vmem>>, vector<36x256xf32>,
    %21 = vector.extract_strided_slice %1 {offsets = [0, 0], sizes = [4, 222], strides = [1, 1]} : vector<4x256xf32> to vector<4x222xf32>
    %22 = vector.extract_strided_slice %18 {offsets = [0, 34], sizes = [1, 222], strides = [1, 1]} : vector<1x256xi32> to vector<1x222xi32>
    %c-2_i32 = arith.constant -2 : i32
    %23 = vector.broadcast %c-2_i32 : i32 to vector<1x222xi32>
    %24 = arith.addi %22, %23 : vector<1x222xi32>
    %c0_i32_7 = arith.constant 0 : i32
    %25 = vector.broadcast %c0_i32_7 : i32 to vector<1x222xi32>
    %26 = arith.cmpi sge, %24, %25 : vector<1x222xi32>
    %27 = vector.extract_strided_slice %18 {offsets = [0, 34], sizes = [1, 222], strides = [1, 1]} : vector<1x256xi32> to vector<1x222xi32>
    %c-2_i32_8 = arith.constant -2 : i32
    %28 = vector.broadcast %c-2_i32_8 : i32 to vector<1x222xi32>
    %29 = arith.addi %27, %28 : vector<1x222xi32>
    %c16_i32_9 = arith.constant 16 : i32
    %30 = vector.broadcast %c16_i32_9 : i32 to vector<1x222xi32>
    %31 = arith.cmpi slt, %29, %30 : vector<1x222xi32>
    %32 = arith.andi %26, %31 : vector<1x222xi1>
    %cst_10 = arith.constant 0.000000e+00 : f32
    %33 = vector.broadcast %cst_10 : f32 to vector<4x222xf32>
    %34 = vector.shape_cast %32 : vector<1x222xi1> to vector<1x222xi1>
    %35 = vector.broadcast %34 : vector<1x222xi1> to vector<4x222xi1>
    %36 = arith.select %35, %21, %33 : vector<4x222xi1>, vector<4x222xf32>
    %c0_11 = arith.constant 0 : index
    %c34 = arith.constant 34 : index
    %37 = vector.load %arg5[%c0_11, %c34] : memref<36x256xf32, #tpu.memory_space<vmem>>, vector<4x222xf32>
    tpu.vector_store %arg5[%c0_11, %c34], %36 {strides = array<i32>} : memref<36x256xf32, #tpu.memory_space<vmem>>, vector<4x222xf32>,
    %38 = vector.extract_strided_slice %1 {offsets = [0, 0], sizes = [4, 224], strides = [1, 1]} : vector<4x256xf32> to vector<4x224xf32>
    %c4 = arith.constant 4 : index
    %c32 = arith.constant 32 : index
    %39 = vector.load %arg5[%c4, %c32] : memref<36x256xf32, #tpu.memory_space<vmem>>, vector<4x224xf32>
    tpu.vector_store %arg5[%c4, %c32], %38 {strides = array<i32>} : memref<36x256xf32, #tpu.memory_space<vmem>>, vector<4x224xf32>,
    %40 = vector.extract_strided_slice %1 {offsets = [0, 0], sizes = [4, 226], strides = [1, 1]} : vector<4x256xf32> to vector<4x226xf32>
    %41 = vector.extract_strided_slice %18 {offsets = [0, 30], sizes = [1, 226], strides = [1, 1]} : vector<1x256xi32> to vector<1x226xi32>
    %c2_i32 = arith.constant 2 : i32
    %42 = vector.broadcast %c2_i32 : i32 to vector<1x226xi32>
    %43 = arith.addi %41, %42 : vector<1x226xi32>
    %c0_i32_12 = arith.constant 0 : i32
    %44 = vector.broadcast %c0_i32_12 : i32 to vector<1x226xi32>
    %45 = arith.cmpi sge, %43, %44 : vector<1x226xi32>
    %46 = vector.extract_strided_slice %18 {offsets = [0, 30], sizes = [1, 226], strides = [1, 1]} : vector<1x256xi32> to vector<1x226xi32>
    %c2_i32_13 = arith.constant 2 : i32
    %47 = vector.broadcast %c2_i32_13 : i32 to vector<1x226xi32>
    %48 = arith.addi %46, %47 : vector<1x226xi32>
    %c16_i32_14 = arith.constant 16 : i32
    %49 = vector.broadcast %c16_i32_14 : i32 to vector<1x226xi32>
    %50 = arith.cmpi slt, %48, %49 : vector<1x226xi32>
    %51 = arith.andi %45, %50 : vector<1x226xi1>
    %cst_15 = arith.constant 0.000000e+00 : f32
    %52 = vector.broadcast %cst_15 : f32 to vector<4x226xf32>
    %53 = vector.shape_cast %51 : vector<1x226xi1> to vector<1x226xi1>
    %54 = vector.broadcast %53 : vector<1x226xi1> to vector<4x226xi1>
    %55 = arith.select %54, %40, %52 : vector<4x226xi1>, vector<4x226xf32>
    %c8 = arith.constant 8 : index
    %c30 = arith.constant 30 : index
    %56 = vector.load %arg5[%c8, %c30] : memref<36x256xf32, #tpu.memory_space<vmem>>, vector<4x226xf32>
    tpu.vector_store %arg5[%c8, %c30], %55 {strides = array<i32>} : memref<36x256xf32, #tpu.memory_space<vmem>>, vector<4x226xf32>,
    %57 = vector.extract_strided_slice %1 {offsets = [0, 0], sizes = [4, 254], strides = [1, 1]} : vector<4x256xf32> to vector<4x254xf32>
    %58 = vector.extract_strided_slice %18 {offsets = [0, 2], sizes = [1, 254], strides = [1, 1]} : vector<1x256xi32> to vector<1x254xi32>
    %c-2_i32_16 = arith.constant -2 : i32
    %59 = vector.broadcast %c-2_i32_16 : i32 to vector<1x254xi32>
    %60 = arith.addi %58, %59 : vector<1x254xi32>
    %c0_i32_17 = arith.constant 0 : i32
    %61 = vector.broadcast %c0_i32_17 : i32 to vector<1x254xi32>
    %62 = arith.cmpi sge, %60, %61 : vector<1x254xi32>
    %63 = vector.extract_strided_slice %18 {offsets = [0, 2], sizes = [1, 254], strides = [1, 1]} : vector<1x256xi32> to vector<1x254xi32>
    %c-2_i32_18 = arith.constant -2 : i32
    %64 = vector.broadcast %c-2_i32_18 : i32 to vector<1x254xi32>
    %65 = arith.addi %63, %64 : vector<1x254xi32>
    %c16_i32_19 = arith.constant 16 : i32
    %66 = vector.broadcast %c16_i32_19 : i32 to vector<1x254xi32>
    %67 = arith.cmpi slt, %65, %66 : vector<1x254xi32>
    %68 = arith.andi %62, %67 : vector<1x254xi1>
    %cst_20 = arith.constant 0.000000e+00 : f32
    %69 = vector.broadcast %cst_20 : f32 to vector<4x254xf32>
    %70 = vector.shape_cast %68 : vector<1x254xi1> to vector<1x254xi1>
    %71 = vector.broadcast %70 : vector<1x254xi1> to vector<4x254xi1>
    %72 = arith.select %71, %57, %69 : vector<4x254xi1>, vector<4x254xf32>
    %c12 = arith.constant 12 : index
    %c2 = arith.constant 2 : index
    %73 = vector.load %arg5[%c12, %c2] : memref<36x256xf32, #tpu.memory_space<vmem>>, vector<4x254xf32>
    tpu.vector_store %arg5[%c12, %c2], %72 {strides = array<i32>} : memref<36x256xf32, #tpu.memory_space<vmem>>, vector<4x254xf32>,
    %c16 = arith.constant 16 : index
    %c0_21 = arith.constant 0 : index
    %74 = vector.load %arg5[%c16, %c0_21] : memref<36x256xf32, #tpu.memory_space<vmem>>, vector<4x256xf32>
    tpu.vector_store %arg5[%c16, %c0_21], %1 {strides = array<i32>} : memref<36x256xf32, #tpu.memory_space<vmem>>, vector<4x256xf32>,
    %75 = vector.extract_strided_slice %1 {offsets = [0, 2], sizes = [4, 254], strides = [1, 1]} : vector<4x256xf32> to vector<4x254xf32>
    %76 = vector.extract_strided_slice %18 {offsets = [0, 0], sizes = [1, 254], strides = [1, 1]} : vector<1x256xi32> to vector<1x254xi32>
    %c2_i32_22 = arith.constant 2 : i32
    %77 = vector.broadcast %c2_i32_22 : i32 to vector<1x254xi32>
    %78 = arith.addi %76, %77 : vector<1x254xi32>
    %c0_i32_23 = arith.constant 0 : i32
    %79 = vector.broadcast %c0_i32_23 : i32 to vector<1x254xi32>
    %80 = arith.cmpi sge, %78, %79 : vector<1x254xi32>
    %81 = vector.extract_strided_slice %18 {offsets = [0, 0], sizes = [1, 254], strides = [1, 1]} : vector<1x256xi32> to vector<1x254xi32>
    %c2_i32_24 = arith.constant 2 : i32
    %82 = vector.broadcast %c2_i32_24 : i32 to vector<1x254xi32>
    %83 = arith.addi %81, %82 : vector<1x254xi32>
    %c16_i32_25 = arith.constant 16 : i32
    %84 = vector.broadcast %c16_i32_25 : i32 to vector<1x254xi32>
    %85 = arith.cmpi slt, %83, %84 : vector<1x254xi32>
    %86 = arith.andi %80, %85 : vector<1x254xi1>
    %cst_26 = arith.constant 0.000000e+00 : f32
    %87 = vector.broadcast %cst_26 : f32 to vector<4x254xf32>
    %88 = vector.shape_cast %86 : vector<1x254xi1> to vector<1x254xi1>
    %89 = vector.broadcast %88 : vector<1x254xi1> to vector<4x254xi1>
    %90 = arith.select %89, %75, %87 : vector<4x254xi1>, vector<4x254xf32>
    %c20 = arith.constant 20 : index
    %c0_27 = arith.constant 0 : index
    %91 = vector.load %arg5[%c20, %c0_27] : memref<36x256xf32, #tpu.memory_space<vmem>>, vector<4x254xf32>
    tpu.vector_store %arg5[%c20, %c0_27], %90 {strides = array<i32>} : memref<36x256xf32, #tpu.memory_space<vmem>>, vector<4x254xf32>,
    %92 = vector.extract_strided_slice %1 {offsets = [0, 30], sizes = [4, 226], strides = [1, 1]} : vector<4x256xf32> to vector<4x226xf32>
    %93 = vector.extract_strided_slice %18 {offsets = [0, 0], sizes = [1, 226], strides = [1, 1]} : vector<1x256xi32> to vector<1x226xi32>
    %c-2_i32_28 = arith.constant -2 : i32
    %94 = vector.broadcast %c-2_i32_28 : i32 to vector<1x226xi32>
    %95 = arith.addi %93, %94 : vector<1x226xi32>
    %c0_i32_29 = arith.constant 0 : i32
    %96 = vector.broadcast %c0_i32_29 : i32 to vector<1x226xi32>
    %97 = arith.cmpi sge, %95, %96 : vector<1x226xi32>
    %98 = vector.extract_strided_slice %18 {offsets = [0, 0], sizes = [1, 226], strides = [1, 1]} : vector<1x256xi32> to vector<1x226xi32>
    %c-2_i32_30 = arith.constant -2 : i32
    %99 = vector.broadcast %c-2_i32_30 : i32 to vector<1x226xi32>
    %100 = arith.addi %98, %99 : vector<1x226xi32>
    %c16_i32_31 = arith.constant 16 : i32
    %101 = vector.broadcast %c16_i32_31 : i32 to vector<1x226xi32>
    %102 = arith.cmpi slt, %100, %101 : vector<1x226xi32>
    %103 = arith.andi %97, %102 : vector<1x226xi1>
    %cst_32 = arith.constant 0.000000e+00 : f32
    %104 = vector.broadcast %cst_32 : f32 to vector<4x226xf32>
    %105 = vector.shape_cast %103 : vector<1x226xi1> to vector<1x226xi1>
    %106 = vector.broadcast %105 : vector<1x226xi1> to vector<4x226xi1>
    %107 = arith.select %106, %92, %104 : vector<4x226xi1>, vector<4x226xf32>
    %c24 = arith.constant 24 : index
    %c0_33 = arith.constant 0 : index
    %108 = vector.load %arg5[%c24, %c0_33] : memref<36x256xf32, #tpu.memory_space<vmem>>, vector<4x226xf32>
    tpu.vector_store %arg5[%c24, %c0_33], %107 {strides = array<i32>} : memref<36x256xf32, #tpu.memory_space<vmem>>, vector<4x226xf32>,
    %109 = vector.extract_strided_slice %1 {offsets = [0, 32], sizes = [4, 224], strides = [1, 1]} : vector<4x256xf32> to vector<4x224xf32>
    %c28 = arith.constant 28 : index
    %c0_34 = arith.constant 0 : index
    %110 = vector.load %arg5[%c28, %c0_34] : memref<36x256xf32, #tpu.memory_space<vmem>>, vector<4x224xf32>
    tpu.vector_store %arg5[%c28, %c0_34], %109 {strides = array<i32>} : memref<36x256xf32, #tpu.memory_space<vmem>>, vector<4x224xf32>,
    %111 = vector.extract_strided_slice %1 {offsets = [0, 34], sizes = [4, 222], strides = [1, 1]} : vector<4x256xf32> to vector<4x222xf32>
    %112 = vector.extract_strided_slice %18 {offsets = [0, 0], sizes = [1, 222], strides = [1, 1]} : vector<1x256xi32> to vector<1x222xi32>
    %c2_i32_35 = arith.constant 2 : i32
    %113 = vector.broadcast %c2_i32_35 : i32 to vector<1x222xi32>
    %114 = arith.addi %112, %113 : vector<1x222xi32>
    %c0_i32_36 = arith.constant 0 : i32
    %115 = vector.broadcast %c0_i32_36 : i32 to vector<1x222xi32>
    %116 = arith.cmpi sge, %114, %115 : vector<1x222xi32>
    %117 = vector.extract_strided_slice %18 {offsets = [0, 0], sizes = [1, 222], strides = [1, 1]} : vector<1x256xi32> to vector<1x222xi32>
    %c2_i32_37 = arith.constant 2 : i32
    %118 = vector.broadcast %c2_i32_37 : i32 to vector<1x222xi32>
    %119 = arith.addi %117, %118 : vector<1x222xi32>
    %c16_i32_38 = arith.constant 16 : i32
    %120 = vector.broadcast %c16_i32_38 : i32 to vector<1x222xi32>
    %121 = arith.cmpi slt, %119, %120 : vector<1x222xi32>
    %122 = arith.andi %116, %121 : vector<1x222xi1>
    %cst_39 = arith.constant 0.000000e+00 : f32
    %123 = vector.broadcast %cst_39 : f32 to vector<4x222xf32>
    %124 = vector.shape_cast %122 : vector<1x222xi1> to vector<1x222xi1>
    %125 = vector.broadcast %124 : vector<1x222xi1> to vector<4x222xi1>
    %126 = arith.select %125, %111, %123 : vector<4x222xi1>, vector<4x222xf32>
    %c32_40 = arith.constant 32 : index
    %c0_41 = arith.constant 0 : index
    %127 = vector.load %arg5[%c32_40, %c0_41] : memref<36x256xf32, #tpu.memory_space<vmem>>, vector<4x222xf32>
    tpu.vector_store %arg5[%c32_40, %c0_41], %126 {strides = array<i32>} : memref<36x256xf32, #tpu.memory_space<vmem>>, vector<4x222xf32>,
    %c0_42 = arith.constant 0 : index
    %c0_43 = arith.constant 0 : index
    %128 = vector.load %arg2[%c0_42, %c0_43] : memref<8x36xf32, #tpu.memory_space<vmem>>, vector<8x36xf32>
    %c0_44 = arith.constant 0 : index
    %c0_45 = arith.constant 0 : index
    %129 = vector.load %arg5[%c0_44, %c0_45] : memref<36x256xf32, #tpu.memory_space<vmem>>, vector<36x256xf32>
    %cst_46 = arith.constant dense<0.000000e+00> : vector<8x256xf32>
    %130 = tpu.matmul %128, %129, %cst_46 {dimension_numbers = #tpu.dot_dimension_numbers<[1], [0], [0], [1], [0, 0, 1, 1], [], []>} : vector<8x36xf32>, vector<36x256xf32>, vector<8x256xf32> -> vector<8x256xf32>
    %c0_47 = arith.constant 0 : index
    %c0_48 = arith.constant 0 : index
    %131 = vector.load %arg3[%c0_47, %c0_48] : memref<8x1xf32, #tpu.memory_space<vmem>>, vector<8x1xf32>
    %132 = vector.broadcast %131 : vector<8x1xf32> to vector<8x256xf32>
    %133 = arith.addf %130, %132 : vector<8x256xf32>
    %cst_49 = arith.constant 0.000000e+00 : f32
    %134 = vector.broadcast %cst_49 : f32 to vector<8x256xf32>
    %135 = arith.maximumf %133, %134 : vector<8x256xf32>
    %136 = vector.shape_cast %135 : vector<8x256xf32> to vector<1x8x256xf32>
    %c0_50 = arith.constant 0 : index
    %c0_51 = arith.constant 0 : index
    %c0_52 = arith.constant 0 : index
    %137 = vector.load %arg4[%c0_50, %c0_51, %c0_52] : memref<1x8x256xf32, #tpu.memory_space<vmem>>, vector<1x8x256xf32>
    tpu.vector_store %arg4[%c0_50, %c0_51, %c0_52], %136 {strides = array<i32>} : memref<1x8x256xf32, #tpu.memory_space<vmem>>, vector<1x8x256xf32>,
    return
  }
  func.func @transform_0(%arg0: i32) -> (i32, i32, i32) {
    %c0_i32 = arith.constant 0 : i32
    %c0_i32_0 = arith.constant 0 : i32
    %c0_i32_1 = arith.constant 0 : i32
    return %arg0, %c0_i32, %c0_i32_0 : i32, i32, i32
  }
  func.func @transform_1(%arg0: i32) -> (i32, i32) {
    %c0_i32 = arith.constant 0 : i32
    %c0_i32_0 = arith.constant 0 : i32
    %c0_i32_1 = arith.constant 0 : i32
    return %c0_i32, %c0_i32_0 : i32, i32
  }
  func.func @transform_2(%arg0: i32) -> (i32, i32) {
    %c0_i32 = arith.constant 0 : i32
    %c0_i32_0 = arith.constant 0 : i32
    %c0_i32_1 = arith.constant 0 : i32
    return %c0_i32, %c0_i32_0 : i32, i32
  }
  func.func @transform_3(%arg0: i32) -> (i32, i32, i32) {
    %c0_i32 = arith.constant 0 : i32
    %c0_i32_0 = arith.constant 0 : i32
    %c0_i32_1 = arith.constant 0 : i32
    return %arg0, %c0_i32, %c0_i32_0 : i32, i32, i32
  }
}

</mosaic_0001>

<llo_original>
// kernel: tpu_custom_call.1
$region0: #{tpu_custom_call.1}
  #allocation0 [shape = 'u32[]', space=smem, size = 0x4, offset = 0x4, fixed_abs, tag = 'smem constant byte address 0x4 - core index']
  #allocation1 [shape = 'u32[144,128]{1,0:T(1,128)}', space=vmem, size = 0x12000, scoped, tag = 'internal scratch']
  #allocation2 [shape = 'f32[36,256]{1,0:T(8,128)}', space=vmem, size = 0xa000, scoped, tag = 'scratch operand']
  %s0 = inlined_call_operand.hbm [shape: f32[2,4,256], index: 0, kind: input, shape index: {}]
  %s1 = inlined_call_operand.vmem [shape: f32[8,36], index: 1, kind: input, shape index: {}]
  %s2 = inlined_call_operand.vmem [shape: f32[8,1], index: 2, kind: input, shape index: {}]
  %s3 = inlined_call_operand.hbm [shape: f32[2,8,256], index: 3, kind: output, shape index: {}]
  %s4 = sld [smem:[#allocation0]]
  $region49: #{tpu_custom_call.1} parent=0
    _
  %s6 = ssub.s32 1, %s4
  %s7 = scalar_select 0, %s6, %s4
  $region1: #{tpu_custom_call.1} parent=0
    #allocation3 [shape = 'u8[8192]{0}', space=vmem, size = 0x2000, scoped, tag = 'input window, operand 0']
    #allocation4 [shape = 's32[2]{0}', space=sflag, size = 0x8, scoped, tag = 'scoped memory for tpu_custom_call.1']
    #allocation5 [shape = 's32[2]{0}', space=sflag, size = 0x8, scoped, tag = 'scoped memory for tpu_custom_call.1']
    #allocation6 [shape = 'u8[16384]{0}', space=vmem, size = 0x4000, scoped, tag = 'output window, operand 0']
    %8 = vsyncpa [#allocation4], 0
    %s9 = scalar_lea.sflag [#allocation4], 1
    %10 = vsyncpa %s9, 0
    %11 = vsyncpa [#allocation5], 0
    %s12 = scalar_lea.sflag [#allocation5], 1
    %13 = vsyncpa %s12, 0
    loop: start=0, step=1, limit=4
    $region2: #{tpu_custom_call.1} parent=1 // loop_pre_header
      _
    $region3: #{tpu_custom_call.1} parent=1 // loop_header
      %s15 = sphi 0, %s19
      %p16 = scmp.ge.s32.totalorder %s15, 4
      %s25 = sphi 0, %s27
      %s28 = sphi 0, %s25
      %s29 = sphi 0, %s28
      %s45 = sphi 0, %s29
      %s49 = sphi 0, %s49
      %s51 = sphi 0, %s49
      %s52 = sphi 0, %s51
      %s66 = sphi 0, %s52
      %s70 = sphi 0, %s70
      %s72 = sphi 0, %s70
      %s73 = sphi 0, %s72
      %s87 = sphi 0, %s73
      %s93 = sphi 0, %s95
      %s96 = sphi 0, %s93
      %s97 = sphi 0, %s96
      %s113 = sphi 0, %s97
    $region4: #{tpu_custom_call.1} parent=1 // loop_header_branch
      %18 = sbr.rel (%p16) target = $region8
    $region5: #{tpu_custom_call.1} parent=1 // loop_body
      %s20 = ssub.s32 %s15, 1
      %s21 = ssub.s32 %s15, 2
      %s22 = sadd.s32 %s15, 1
      %s23 = ssub.s32 %s15, %s22
      %p24 = scmp.eq.s32.totalorder %s23, 0
      %s26 = sadd.s32 %s25, 1
      %s27 = scalar_select %p24, %s25, %s26
      %p30 = pneg %p24
      %p31 = scmp.eq.s32.totalorder %s15, 1
      %p32 = por %p30, %p31
      %p33 = scmp.ne.s32.totalorder %s25, %s28
      %p34 = scmp.eq.s32.totalorder %s15, 0
      %p35 = por %p33, %p34
      %p36 = scmp.ne.s32.totalorder %s25, %s28
      %p37 = scmp.eq.s32.totalorder %s20, 1
      %p38 = por %p36, %p37
      %p39 = scmp.ne.s32.totalorder %s28, %s29
      %p40 = scmp.eq.s32.totalorder %s20, 0
      %p41 = por %p39, %p40
      %p42 = scmp.ne.s32.totalorder %s28, %s29
      %p43 = scmp.eq.s32.totalorder %s21, 1
      %p44 = por %p42, %p43
      %p46 = scmp.ne.s32.totalorder %s29, %s45
      %p47 = scmp.eq.s32.totalorder %s21, 0
      %p48 = por %p46, %p47
      %s50 = sadd.s32 %s49, 1
      %p53 = scmp.eq.s32.totalorder %s15, 1
      %p54 = scmp.ne.s32.totalorder %s49, %s51
      %p55 = scmp.eq.s32.totalorder %s15, 0
      %p56 = por %p54, %p55
      %p57 = scmp.ne.s32.totalorder %s49, %s51
      %p58 = scmp.eq.s32.totalorder %s20, 1
      %p59 = por %p57, %p58
      %p60 = scmp.ne.s32.totalorder %s51, %s52
      %p61 = scmp.eq.s32.totalorder %s20, 0
      %p62 = por %p60, %p61
      %p63 = scmp.ne.s32.totalorder %s51, %s52
      %p64 = scmp.eq.s32.totalorder %s21, 1
      %p65 = por %p63, %p64
      %p67 = scmp.ne.s32.totalorder %s52, %s66
      %p68 = scmp.eq.s32.totalorder %s21, 0
      %p69 = por %p67, %p68
      %s71 = sadd.s32 %s70, 1
      %p74 = scmp.eq.s32.totalorder %s15, 1
      %p75 = scmp.ne.s32.totalorder %s70, %s72
      %p76 = scmp.eq.s32.totalorder %s15, 0
      %p77 = por %p75, %p76
      %p78 = scmp.ne.s32.totalorder %s70, %s72
      %p79 = scmp.eq.s32.totalorder %s20, 1
      %p80 = por %p78, %p79
      %p81 = scmp.ne.s32.totalorder %s72, %s73
      %p82 = scmp.eq.s32.totalorder %s20, 0
      %p83 = por %p81, %p82
      %p84 = scmp.ne.s32.totalorder %s72, %s73
      %p85 = scmp.eq.s32.totalorder %s21, 1
      %p86 = por %p84, %p85
      %p88 = scmp.ne.s32.totalorder %s73, %s87
      %p89 = scmp.eq.s32.totalorder %s21, 0
      %p90 = por %p88, %p89
      %s91 = ssub.s32 %s15, %s22
      %p92 = scmp.eq.s32.totalorder %s91, 0
      %s94 = sadd.s32 %s93, 1
      %s95 = scalar_select %p92, %s93, %s94
      %p98 = pneg %p92
      %p99 = scmp.eq.s32.totalorder %s15, 1
      %p100 = por %p98, %p99
      %p101 = scmp.ne.s32.totalorder %s93, %s96
      %p102 = scmp.eq.s32.totalorder %s15, 0
      %p103 = por %p101, %p102
      %p104 = scmp.ne.s32.totalorder %s93, %s96
      %p105 = scmp.eq.s32.totalorder %s20, 1
      %p106 = por %p104, %p105
      %p107 = scmp.ne.s32.totalorder %s96, %s97
      %p108 = scmp.eq.s32.totalorder %s20, 0
      %p109 = por %p107, %p108
      %p110 = scmp.ne.s32.totalorder %s96, %s97
      %p111 = scmp.eq.s32.totalorder %s21, 1
      %p112 = por %p110, %p111
      %p114 = scmp.ne.s32.totalorder %s97, %s113
      %p115 = scmp.eq.s32.totalorder %s21, 0
      %p116 = por %p114, %p115
      %p117 = scmp.le.s32.totalorder 1, %s15
      %p118 = scmp.lt.s32.totalorder %s15, 3
      %p119 = pnand %p117, %p118
      %p120 = pneg %p119
      // Predicated region
      $region9: #{tpu_custom_call.1} parent=5 // pred_check
        _
      $region10: #{tpu_custom_call.1} parent=5 // pred_check_branch
        %122 = sbr.rel (%p119) target = $region12
      $region11: #{tpu_custom_call.1} parent=5 // pred_region
        %s123 = ssub.s32 %s15, 1
        // Predicated region
        $region13: #{tpu_custom_call.1} parent=11 // pred_check
          %p124 = pneg %p62
        $region14: #{tpu_custom_call.1} parent=11 // pred_check_branch
          %126 = sbr.rel (%p124) target = $region16
        $region15: #{tpu_custom_call.1} parent=11 // pred_region
          _
        $region16: #{tpu_custom_call.1} parent=11 // pred_fallthru
          _
        // Predicated region
        $region17: #{tpu_custom_call.1} parent=11 // pred_check
          %p127 = pneg %p83
        $region18: #{tpu_custom_call.1} parent=11 // pred_check_branch
          %129 = sbr.rel (%p127) target = $region20
        $region19: #{tpu_custom_call.1} parent=11 // pred_region
          _
        $region20: #{tpu_custom_call.1} parent=11 // pred_fallthru
          _
      $region12: #{tpu_custom_call.1} parent=5 // pred_fallthru
        _
      %p130 = scmp.lt.s32.totalorder %s15, 2
      // Predicated region
      $region21: #{tpu_custom_call.1} parent=5 // pred_check
        %p131 = pneg %p130
      $region22: #{tpu_custom_call.1} parent=5 // pred_check_branch
        %133 = sbr.rel (%p131) target = $region24
      $region23: #{tpu_custom_call.1} parent=5 // pred_region
        // Predicated region
        $region25: #{tpu_custom_call.1} parent=23 // pred_check
          %p134 = pneg %p35
        $region26: #{tpu_custom_call.1} parent=23 // pred_check_branch
          %136 = sbr.rel (%p134) target = $region28
        $region27: #{tpu_custom_call.1} parent=23 // pred_region
          %s137 = sand.u32 %s25, 1
          %s138 = scalar_lea.sflag [#allocation4], %s137
          %s139 = sand.u32 %s25, 1
          %s140 = smul.addr %s139, 8
          %s141 = scalar_lea.vmem [#allocation3], %s140
          %s143 = ssub.s32 128, 128
          %144 = vsyncadd %s138, %s143
          %s145 = smul.addr %s15, 2
          %s146 = smul.addr %s145, 64
          %s147 = scalar_lea.hbm %s0, %s146
          %s149 = sshll.u32 %s141, 4
          %s150 = int_to_ptr.vmem [resolvable:$true] %s149
          %152 = dma.hbm_to_vmem [thread:$0]  %s147, 128, %s150, %s138
        $region28: #{tpu_custom_call.1} parent=23 // pred_fallthru
          _
      $region24: #{tpu_custom_call.1} parent=5 // pred_fallthru
        _
      %p153 = scmp.le.s32.totalorder 1, %s15
      %p154 = scmp.lt.s32.totalorder %s15, 3
      %p155 = pnand %p153, %p154
      %p156 = pneg %p155
      // Predicated region
      $region29: #{tpu_custom_call.1} parent=5 // pred_check
        _
      $region30: #{tpu_custom_call.1} parent=5 // pred_check_branch
        %158 = sbr.rel (%p155) target = $region32
      $region31: #{tpu_custom_call.1} parent=5 // pred_region
        %s159 = ssub.s32 %s15, 1
        %s160 = sand.u32 %s28, 1
        %s161 = scalar_lea.sflag [#allocation4], %s160
        %s162 = sand.u32 %s28, 1
        %s163 = smul.addr %s162, 8
        %s164 = scalar_lea.vmem [#allocation3], %s163
        // Predicated region
        $region33: #{tpu_custom_call.1} parent=31 // pred_check
          %p165 = pneg %p41
        $region34: #{tpu_custom_call.1} parent=31 // pred_check_branch
          %167 = sbr.rel (%p165) target = $region36
        $region35: #{tpu_custom_call.1} parent=31 // pred_region
          %168 = dma.done %s161, 128
        $region36: #{tpu_custom_call.1} parent=31 // pred_fallthru
          _
        %s169 = sand.u32 %s28, 1
        %s170 = scalar_lea.sflag [#allocation4], %s169
        %s171 = sand.u32 %s28, 1
        %s172 = smul.addr %s171, 8
        %s173 = scalar_lea.vmem [#allocation3], %s172
        %p174 = pneg %p41
        %p175 = pneg %p38
        %p176 = pneg %p62
        %p177 = pneg %p59
        %p178 = pneg %p83
        %p179 = pneg %p80
        %p180 = pneg %p109
        %p181 = pneg %p106
        %s182 = sand.u32 %s96, 1
        %s183 = scalar_lea.sflag [#allocation5], %s182
        %s184 = sand.u32 %s96, 1
        %s185 = smul.addr %s184, 16
        %s186 = scalar_lea.vmem [#allocation6], %s185
        %v187 = vld [vmem:[%s164] sm:$0xff]
        %v188 = vlaneseq
        %v189 = vand.u32 %v188, 127
        %v190 = vadd.s32 %v189, 128
        %vm191 = vcmp.lt.s32.totalorder %v189, 0
        %v192 = vsub.s32 0, %v189
        %v193 = vsel %vm191, %v192, %v189
        %v194 = vshrl.u32 %v193, 4
        %v195 = vand.u32 %v193, 15
        %v196 = vsub.s32 0, %v195
        %v197 = vsel %vm191, %v196, %v195
        %vm198 = vcmp.lt.s32.totalorder %v190, 0
        %v199 = vsub.s32 0, %v190
        %v200 = vsel %vm198, %v199, %v190
        %v201 = vshrl.u32 %v200, 4
        %v202 = vand.u32 %v200, 15
        %v203 = vsub.s32 0, %v202
        %v204 = vsel %vm198, %v203, %v202
        %vm205 = vcmp.ne.s32.totalorder %v197, 0
        %vm206 = vcmp.ne.s32.totalorder %v204, 0
        %vm207 = vcmp.lt.s32.totalorder %v197, 0
        %vm208 = vcmp.lt.s32.totalorder %v204, 0
        %vm209 = vmand %vm207, %vm205
        %vm210 = vmand %vm208, %vm206
        %v211 = vadd.s32 %v197, 16
        %v212 = vadd.s32 %v204, 16
        %v213 = vsel %vm209, %v211, %v197
        %v214 = vsel %vm210, %v212, %v204
        %215 = vst [vmem:[#allocation2] sm:$0xff] 0.0
        %216 = vst [vmem:[#allocation2 + $0x8] sm:$0xff] 0.0
        %217 = vst [vmem:[#allocation2 + $0x10] sm:$0xff] 0.0
        %218 = vst [vmem:[#allocation2 + $0x18] sm:$0xff] 0.0
        %219 = vst [vmem:[#allocation2 + $0x20] sm:$0xff] 0.0
        %220 = vst [vmem:[#allocation2 + $0x28] sm:$0xff] 0.0
        %221 = vst [vmem:[#allocation2 + $0x30] sm:$0xff] 0.0
        %222 = vst [vmem:[#allocation2 + $0x38] sm:$0xff] 0.0
        %223 = vst [vmem:[#allocation2 + $0x40] sm:$0xf] 0.0
        %224 = vst [vmem:[#allocation2 + $0x48] sm:$0xf] 0.0
        %v225 = vadd.s32 %v213, 4294967294
        %v226 = vadd.s32 %v214, 4294967294
        %vm227 = vcmp.ge.s32.totalorder %v225, 0
        %vm228 = vcmp.ge.s32.totalorder %v226, 0
        %vm229 = vcmp.lt.s32.totalorder %v225, 16
        %vm230 = vcmp.lt.s32.totalorder %v226, 16
        %vm231 = vmand %vm227, %vm229
        %vm232 = vmand %vm228, %vm230
        %v233 = vsel %vm231, 1, 0
        %v234 = vsel %vm232, 1, 0
        %vm235 = vcmp.eq.s32.totalorder %v233, 1
        %vm236 = vcmp.eq.s32.totalorder %v234, 1
        %v238 = vcombine.high %v187, %v187
        %239 = vrot.lane.b32.xlu0 %v187, 34
        %v240 = vpop.permute.xlu0 %239
        %241 = vrot.lane.b32.xlu0 %v238, 34
        %v242 = vpop.permute.xlu0 %241
        %vm243 = vcmask 277504
        %v244 = vsel %vm243, %v240, %v242
        %v247 = vsel %vm235, %v240, 0.0
        %v248 = vsel %vm236, %v244, 0.0
        %vm249 = vcmask 1043728
        %250 = vst.msk [vmem:[#allocation2] sm:$0xf] %vm249, %v247
        %251 = vst [vmem:[#allocation2 + $0x8] sm:$0xf] %v248
        %v252 = vcombine.low %v187, %v187
        %253 = vrot.lane.b32.xlu0 %v252, 32
        %v254 = vpop.permute.xlu0 %253
        %255 = vrot.lane.b32.xlu0 %v187, 32
        %v256 = vpop.permute.xlu0 %255
        %vm257 = vcmask 261120
        %v258 = vsel %vm257, %v254, %v256
        %vm261 = vcmask 1047812
        %262 = vst.msk [vmem:[#allocation2] sm:$0xf0] %vm261, %v254
        %263 = vst [vmem:[#allocation2 + $0x8] sm:$0xf0] %v258
        %v264 = vadd.s32 %v213, 2
        %v265 = vadd.s32 %v214, 2
        %vm266 = vcmp.ge.s32.totalorder %v264, 0
        %vm267 = vcmp.ge.s32.totalorder %v265, 0
        %vm268 = vcmp.lt.s32.totalorder %v264, 16
        %vm269 = vcmp.lt.s32.totalorder %v265, 16
        %vm270 = vmand %vm266, %vm268
        %vm271 = vmand %vm267, %vm269
        %v272 = vsel %vm270, 1, 0
        %v273 = vsel %vm271, 1, 0
        %vm274 = vcmp.eq.s32.totalorder %v272, 1
        %vm275 = vcmp.eq.s32.totalorder %v273, 1
        %276 = vrot.lane.b32.xlu0 %v187, 30
        %v277 = vpop.permute.xlu0 %276
        %278 = vrot.lane.b32.xlu0 %v238, 30
        %v279 = vpop.permute.xlu0 %278
        %vm280 = vcmask 244736
        %v281 = vsel %vm280, %v277, %v279
        %v284 = vsel %vm274, %v277, 0.0
        %v285 = vsel %vm275, %v281, 0.0
        %vm286 = vcmask 1043696
        %287 = vst.msk [vmem:[#allocation2 + $0x10] sm:$0xf] %vm286, %v284
        %288 = vst [vmem:[#allocation2 + $0x18] sm:$0xf] %v285
        %289 = vrot.lane.b32.xlu0 %v187, 2
        %v290 = vpop.permute.xlu0 %289
        %291 = vrot.lane.b32.xlu0 %v238, 2
        %v292 = vpop.permute.xlu0 %291
        %vm293 = vcmask 15360
        %v294 = vsel %vm293, %v290, %v292
        %v297 = vsel %vm235, %v290, 0.0
        %v298 = vsel %vm236, %v294, 0.0
        %v301 = vrot.slane %v297, 4
        %v302 = vrot.slane %v298, 4
        %vm305 = vcmask 1047572
        %306 = vst.msk [vmem:[#allocation2 + $0x10] sm:$0xf0] %vm305, %v301
        %307 = vst [vmem:[#allocation2 + $0x18] sm:$0xf0] %v302
        %309 = vst [vmem:[#allocation2 + $0x20] sm:$0xf] %v187
        %310 = vst [vmem:[#allocation2 + $0x28] sm:$0xf] %v238
        %311 = vrot.lane.b32.xlu0 %v187, 126
        %v312 = vpop.permute.xlu0 %311
        %313 = vrot.lane.b32.xlu0 %v238, 126
        %v314 = vpop.permute.xlu0 %313
        %vm315 = vcmask 1031168
        %v316 = vsel %vm315, %v312, %v314
        %v319 = vsel %vm274, %v316, 0.0
        %v320 = vsel %vm275, %v314, 0.0
        %v323 = vrot.slane %v319, 4
        %v324 = vrot.slane %v320, 4
        %327 = vst [vmem:[#allocation2 + $0x20] sm:$0xf0] %v323
        %vm328 = vcmask 1031172
        %329 = vst.msk [vmem:[#allocation2 + $0x28] sm:$0xf0] %vm328, %v324
        %330 = vrot.lane.b32.xlu0 %v187, 98
        %v331 = vpop.permute.xlu0 %330
        %332 = vrot.lane.b32.xlu0 %v238, 98
        %v333 = vpop.permute.xlu0 %332
        %vm334 = vcmask 801792
        %v335 = vsel %vm334, %v331, %v333
        %v338 = vsel %vm235, %v335, 0.0
        %v339 = vsel %vm236, %v333, 0.0
        %340 = vst [vmem:[#allocation2 + $0x30] sm:$0xf] %v338
        %vm341 = vcmask 797696
        %342 = vst.msk [vmem:[#allocation2 + $0x38] sm:$0xf] %vm341, %v339
        %343 = vrot.lane.b32.xlu0 %v252, 96
        %v344 = vpop.permute.xlu0 %343
        %345 = vrot.lane.b32.xlu0 %v187, 96
        %v346 = vpop.permute.xlu0 %345
        %vm347 = vcmask 785408
        %v348 = vsel %vm347, %v344, %v346
        %351 = vst [vmem:[#allocation2 + $0x30] sm:$0xf0] %v348
        %vm352 = vcmask 785412
        %353 = vst.msk [vmem:[#allocation2 + $0x38] sm:$0xf0] %vm352, %v346
        %354 = vrot.lane.b32.xlu0 %v187, 94
        %v355 = vpop.permute.xlu0 %354
        %356 = vrot.lane.b32.xlu0 %v238, 94
        %v357 = vpop.permute.xlu0 %356
        %vm358 = vcmask 769024
        %v359 = vsel %vm358, %v355, %v357
        %v362 = vsel %vm274, %v359, 0.0
        %v363 = vsel %vm275, %v357, 0.0
        %364 = vst [vmem:[#allocation2 + $0x40] sm:$0xf] %v362
        %vm365 = vcmask 764928
        %366 = vst.msk [vmem:[#allocation2 + $0x48] sm:$0xf] %vm365, %v363
        %v367 = vld [vmem:[%s1] sm:$0xff]
        %v368 = vld [vmem:[#allocation2] sm:$0xff]
        %v369 = vld [vmem:[#allocation2 + $0x8] sm:$0xff]
        %v370 = vld [vmem:[#allocation2 + $0x10] sm:$0xff]
        %v371 = vld [vmem:[#allocation2 + $0x18] sm:$0xff]
        %v372 = vld [vmem:[#allocation2 + $0x20] sm:$0xff]
        %v373 = vld [vmem:[#allocation2 + $0x28] sm:$0xff]
        %v374 = vld [vmem:[#allocation2 + $0x30] sm:$0xff]
        %v375 = vld [vmem:[#allocation2 + $0x38] sm:$0xff]
        %v376 = vld [vmem:[#allocation2 + $0x40] sm:$0xf]
        %v377 = vld [vmem:[#allocation2 + $0x48] sm:$0xf]
        %v378 = vld [vmem:[%s2] sm:$0xff]
        %380 = vset.pattern.permute.xlu0 0
        %381 = vperm.xlu0 %380, %v378
        %v382 = vpop.permute.xlu0 %381
        %vm384 = vcmask 293888
        %v386 = vsel %vm384, %v367, 0
        %vm388 = vcmask 1043456
        %v390 = vsel %vm388, %v376, 0
        %v393 = vsel %vm388, %v377, 0
        %395 = vmatprep.subr.mxu0 %v369
        %396 = vmatpush1.msra.mxu0 %v368
        %397 = vmatprep.subr.mxu0 %v371
        %398 = vmatpush1.msra.mxu0 %v370
        %399 = vmatprep.subr.mxu0 %v373
        %400 = vmatpush1.msra.mxu0 %v372
        %401 = vmatprep.subr.mxu0 %v375
        %402 = vmatpush1.msra.mxu0 %v374
        %403 = vmatprep.subr.mxu0 %v393
        %404 = vmatpush1.msra.mxu0 %v390
        %405 = vmatprep.subr.mxu0 0.0
        %406 = vmatpush1.msra.mxu0 0.0
        %407 = vmatprep.subr.mxu0 0.0
        %408 = vmatpush1.msra.mxu0 0.0
        %409 = vmatprep.subr.mxu0 0.0
        %410 = vmatpush1.msra.mxu0 0.0
        %411 = vmatprep.subr.mxu0 0.0
        %412 = vmatpush1.msra.mxu0 0.0
        %413 = vmatprep.subr.mxu0 0.0
        %414 = vmatpush1.msra.mxu0 0.0
        %415 = vmatprep.subr.mxu0 0.0
        %416 = vmatpush1.msra.mxu0 0.0
        %417 = vmatprep.subr.mxu0 0.0
        %418 = vmatpush1.msra.mxu0 0.0
        %419 = vmatprep.subr.mxu0 0.0
        %420 = vmatpush1.msra.mxu0 0.0
        %421 = vmatprep.subr.mxu0 0.0
        %422 = vmatpush1.msra.mxu0 0.0
        %423 = vmatprep.subr.mxu0 0.0
        %424 = vmatpush1.msra.mxu0 0.0
        %425 = vmatprep.subr.mxu0 0.0
        %426 = vmatpush1.msra.mxu0 0.0
        %427 = vmatprep.subr.mxu0 0.0
        %428 = vmatpush1.msra.mxu0 0.0
        %429 = vmatprep.subr.mxu0 0.0
        %430 = vmatpush1.msra.mxu0 0.0
        %431 = vmatprep.subr.mxu0 0.0
        %432 = vmatpush1.msra.mxu0 0.0
        %433 = vmatprep.subr.mxu0 0.0
        %434 = vmatpush1.msra.mxu0 0.0
        %435 = vmatprep.subr.mxu0 0.0
        %436 = vmatpush1.msra.mxu0 0.0
        %437 = vmatprep.subr.mxu0 0.0
        %438 = vmatpush1.msra.mxu0 0.0
        %439 = vmatprep.subr.mxu0 0.0
        %440 = vmatpush1.msra.mxu0 0.0
        %441 = vmatprep.subr.mxu0 0.0
        %442 = vmatpush1.msra.mxu0 0.0
        %443 = vmatprep.subr.mxu0 0.0
        %444 = vmatpush1.msra.mxu0 0.0
        %445 = vmatprep.subr.mxu0 0.0
        %446 = vmatpush1.msra.mxu0 0.0
        %447 = vmatprep.subr.mxu0 0.0
        %448 = vmatpush1.msra.mxu0 0.0
        %449 = vmatprep.subr.mxu0 0.0
        %450 = vmatpush1.msra.mxu0 0.0
        %451 = vmatprep.subr.mxu0 0.0
        %452 = vmatpush1.msra.mxu0 0.0
        %453 = vmatprep.subr.mxu0 0.0
        %454 = vmatpush1.msra.mxu0 0.0
        %455 = vmatprep.subr.mxu0 0.0
        %456 = vmatpush1.msra.mxu0 0.0
        %457 = vmatprep.subr.mxu0 0.0
        %458 = vmatpush1.msra.mxu0 0.0
        %459 = vmatprep.mubr.f32.mxu0 0.0
        %460 = vmatmul.mubr.f32.gmra.mrb[0].mxu0 %v386
        %v461 = vpop.f32.mrb[0].mxu0
        %v462 = vadd.f32 %v382, %v461
        %v463 = vpop.f32.mrb[0].mxu0
        %v464 = vadd.f32 %v382, %v463
        %465 = vdwg.mxu0
        %v466 = vmax.f32 %v462, 0.0
        %v467 = vmax.f32 %v464, 0.0
        %468 = vst [vmem:[%s186] sm:$0xff] %v466
        %469 = vst [vmem:[%s186 + $0x8] sm:$0xff] %v467
        %s470 = sand.u32 %s96, 1
        %s471 = scalar_lea.sflag [#allocation5], %s470
        %s472 = sand.u32 %s96, 1
        %s473 = smul.addr %s472, 16
        %s474 = scalar_lea.vmem [#allocation6], %s473
        // Predicated region
        $region37: #{tpu_custom_call.1} parent=31 // pred_check
          %p475 = pneg %p106
        $region38: #{tpu_custom_call.1} parent=31 // pred_check_branch
          %477 = sbr.rel (%p475) target = $region40
        $region39: #{tpu_custom_call.1} parent=31 // pred_region
          %s479 = ssub.s32 256, 256
          %480 = vsyncadd %s471, %s479
          %s481 = smul.addr %s20, 2
          %s482 = smul.addr %s481, 128
          %s483 = scalar_lea.hbm %s3, %s482
          %s485 = sshll.u32 %s474, 4
          %s486 = int_to_ptr.vmem [resolvable:$true] %s485
          %488 = dma.vmem_to_hbm [thread:$0]  %s486, 256, %s483, %s471
        $region40: #{tpu_custom_call.1} parent=31 // pred_fallthru
          _
      $region32: #{tpu_custom_call.1} parent=5 // pred_fallthru
        _
      %p489 = scmp.le.s32.totalorder 2, %s15
      // Predicated region
      $region41: #{tpu_custom_call.1} parent=5 // pred_check
        %p490 = pneg %p489
      $region42: #{tpu_custom_call.1} parent=5 // pred_check_branch
        %492 = sbr.rel (%p490) target = $region44
      $region43: #{tpu_custom_call.1} parent=5 // pred_region
        %s493 = ssub.s32 %s15, 2
        // Predicated region
        $region45: #{tpu_custom_call.1} parent=43 // pred_check
          %p494 = pneg %p112
        $region46: #{tpu_custom_call.1} parent=43 // pred_check_branch
          %496 = sbr.rel (%p494) target = $region48
        $region47: #{tpu_custom_call.1} parent=43 // pred_region
          %s497 = sand.u32 %s97, 1
          %s498 = scalar_lea.sflag [#allocation5], %s497
          %s499 = sand.u32 %s97, 1
          %s500 = smul.addr %s499, 16
          %s501 = scalar_lea.vmem [#allocation6], %s500
          %502 = dma.done %s498, 256
        $region48: #{tpu_custom_call.1} parent=43 // pred_fallthru
          _
      $region44: #{tpu_custom_call.1} parent=5 // pred_fallthru
        _
    $region6: #{tpu_custom_call.1} parent=1 // loop_footer
      %s19 = sadd.s32 1, %s15
    $region7: #{tpu_custom_call.1} parent=1 // loop_footer_branch
      %14 = sbr.rel target = $region3
    $region8: #{tpu_custom_call.1} parent=1 // loop_exit
      _
    %503 = vsyncpa [#allocation4], 1
    %s504 = scalar_lea.sflag [#allocation4], 1
    %505 = vsyncpa %s504, 1
    %506 = vsyncpa [#allocation5], 1
    %s507 = scalar_lea.sflag [#allocation5], 1
    %508 = vsyncpa %s507, 1

</llo_original>
